<compile_context>
chip_gen: v7x
topology: tpu7x:2x2x1
jax: 0.10.0
libtpu: 0.0.40
codegen_flags: <defaults>
</compile_context>

<pallas_src>
import jax
import jax.numpy as jnp
from jax import lax
from jax.experimental import pallas as pl
from jax.experimental.pallas import tpu as pltpu

EPS = 1e-5                      # BatchNorm2d default eps
NONPOOL_TAPS = (0, 1, 2, 3, 6)  # 3x3 taps (kh*3+kw) outside the 2x2 pool window
POOL_TAPS = (4, 5, 7, 8)        # taps (1,1),(1,2),(2,1),(2,2) == the 2x2 pool window


def _pick_tile(ms, cap):
    """Lane tile over per-sample pixels: as big as possible (amortize the ~0.35us
    per-grid-step overhead), a multiple of 128, preferably an exact divisor of ms."""
    if ms <= cap:
        return ms               # single block per sample (full-dim => layout legal)
    for t in range(cap, 127, -128):
        if ms % t == 0:
            return t
    return cap                  # fall back to a padded last tile


def initial_block_forward(x_nchw, weight, bias, gamma, beta, alpha,
                          conv_dtype=jnp.bfloat16):
    N, Cin, H, W = x_nchw.shape
    Cc = weight.shape[0]                    # out_channels - 3
    Cout = Cc + Cin                         # concat width == BN width (needs Cin == 3)
    assert Cin == 3, "InitialBlock requires in_channels == 3 (concat width == BN width)"
    assert H % 2 == 0 and W % 2 == 0, "even H, W assumed (conv & pool shapes agree)"
    assert gamma.shape == (Cout,) and beta.shape == (Cout,)

    Ho, Wo = H // 2, W // 2
    MS = Ho * Wo                            # pixels per sample
    M = N * MS                              # total pixels (BN statistic count)
    K = 9 * Cin + 1                         # 27 conv taps + 1 bias (ones) row
    KP = ((K + 7) // 8) * 8                 # pad K to a sublane multiple -> 32
    POOL_OFF = len(NONPOOL_TAPS) * Cin + 1  # = 16 for Cin == 3 (8-aligned pool group)

    lane_cap = 16384 if jnp.dtype(conv_dtype).itemsize <= 2 else 8192
    TMS = _pick_tile(MS, lane_cap)
    G = -(-MS // TMS)
    MS_pad = G * TMS
    y_dtype = conv_dtype                    # inter-pass intermediate dtype

    # ---------------- wrapper glue: per-sample transposed im2col ------------------
    # Layout (N, KP, MS): taps/channels on sublanes, per-sample pixels on lanes.
    # Cast to conv_dtype FIRST so the im2col slab is written in bf16 (half the bytes).
    x_nhwc = jnp.transpose(x_nchw, (0, 2, 3, 1)).astype(conv_dtype)
    x_pad = jnp.pad(x_nhwc, ((0, 0), (1, 1), (1, 1), (0, 0)))

    def tap(t):
        kh, kw = t // 3, t % 3
        return x_pad[:, kh:kh + 2 * Ho:2, kw:kw + 2 * Wo:2, :]      # (N, Ho, Wo, Cin)

    def flat(tap_list):
        s = jnp.stack([tap(t) for t in tap_list], axis=0)           # (T, N, Ho, Wo, Cin)
        return jnp.transpose(s, (1, 0, 4, 2, 3)).reshape(N, len(tap_list) * Cin, MS)

    pt = jnp.concatenate(
        [flat(NONPOOL_TAPS),                                         # rows 0 .. 5*Cin-1
         jnp.ones((N, 1, MS), conv_dtype),                           # bias row
         flat(POOL_TAPS),                                            # rows POOL_OFF ..
         jnp.zeros((N, KP - K, MS), conv_dtype)], axis=1)            # (N, KP, MS)
    if MS_pad != MS:
        pt = jnp.pad(pt, ((0, 0), (0, 0), (0, MS_pad - MS)))

    # Weights (Cc, Cin, 3, 3) -> (Cout, KP) in the reordered K layout, bias folded in.
    w27 = jnp.transpose(weight, (0, 2, 3, 1)).reshape(Cc, 9 * Cin)   # col = tap*Cin + ci
    cols = [w27[:, t * Cin:(t + 1) * Cin] for t in NONPOOL_TAPS]
    cols.append(bias[:, None].astype(jnp.float32))
    cols += [w27[:, t * Cin:(t + 1) * Cin] for t in POOL_TAPS]
    wt = jnp.zeros((Cout, KP), jnp.float32)
    wt = wt.at[:Cc, :K].set(jnp.concatenate(cols, axis=1).astype(jnp.float32))
    wt = wt.astype(conv_dtype)

    # ------------------- pass 1: conv + pool + per-tile BN stats ------------------
    def conv_pool_stats_kernel(p_ref, w_ref, y_ref, s_ref):
        p = p_ref[0]                                                     # (KP, TMS)
        # conv branch: one (Cout, KP) @ (KP, TMS) MXU pass, f32 accumulation,
        # bias folded in via the ones row.
        z = jnp.dot(w_ref[...], p, preferred_element_type=jnp.float32)   # (Cout, TMS)
        zc = z[:Cc, :]
        # maxpool branch: the 2x2 pool window == the contiguous pool-tap rows.
        p00 = p[POOL_OFF + 0 * Cin:POOL_OFF + 1 * Cin, :]
        p01 = p[POOL_OFF + 1 * Cin:POOL_OFF + 2 * Cin, :]
        p10 = p[POOL_OFF + 2 * Cin:POOL_OFF + 3 * Cin, :]
        p11 = p[POOL_OFF + 3 * Cin:POOL_OFF + 4 * Cin, :]
        pool = jnp.maximum(jnp.maximum(p00, p01),
                           jnp.maximum(p10, p11)).astype(jnp.float32)    # (Cin, TMS)
        # write the two channel groups directly (no materialized concat)
        y_ref[0, :Cc, :] = zc.astype(y_dtype)
        y_ref[0, Cc:, :] = pool.astype(y_dtype)
        # BN partial sums in f32 BEFORE the (possibly bf16) store; mask padded lanes.
        if MS_pad != MS:
            col = pl.program_id(1) * TMS + lax.broadcasted_iota(jnp.int32, (1, TMS), 1)
            valid = col < MS
            zc = jnp.where(valid, zc, 0.0)
            pool = jnp.where(valid, pool, 0.0)
        s1 = jnp.concatenate([jnp.sum(zc, axis=1, keepdims=True),
                              jnp.sum(pool, axis=1, keepdims=True)], axis=0)
        s2 = jnp.concatenate([jnp.sum(zc * zc, axis=1, keepdims=True),
                              jnp.sum(pool * pool, axis=1, keepdims=True)], axis=0)
        s_ref[0, 0] = jnp.concatenate([s1, s2], axis=1)                   # (Cout, 2)

    y_flat, stats = pl.pallas_call(
        conv_pool_stats_kernel,
        out_shape=(jax.ShapeDtypeStruct((N, Cout, MS_pad), y_dtype),
                   jax.ShapeDtypeStruct((N, G, Cout, 2), jnp.float32)),
        grid=(N, G),
        in_specs=[pl.BlockSpec((1, KP, TMS), lambda n, s: (n, 0, s)),
                  pl.BlockSpec((Cout, KP), lambda n, s: (0, 0))],
        out_specs=(pl.BlockSpec((1, Cout, TMS), lambda n, s: (n, 0, s)),
                   pl.BlockSpec((1, 1, Cout, 2), lambda n, s: (n, s, 0, 0))),
        compiler_params=pltpu.CompilerParams(
            dimension_semantics=("parallel", "parallel")),
    )(pt, wt)

    # ---------- tiny host-side reduction: global mean/var -> scale/shift ----------
    s = jnp.sum(stats, axis=(0, 1))                    # (Cout, 2)
    mean = s[:, 0] / M
    var = jnp.maximum(s[:, 1] / M - mean * mean, 0.0)  # biased variance (training BN)
    scale = gamma.astype(jnp.float32) * lax.rsqrt(var + EPS)
    shift = beta.astype(jnp.float32) - mean * scale
    prm = jnp.stack([scale, shift,
                     jnp.full((Cout,), alpha, jnp.float32),
                     jnp.zeros((Cout,), jnp.float32)], axis=1)            # (Cout, 4)

    # ----------------------- pass 2: normalize + PReLU ----------------------------
    def bn_prelu_kernel(y_ref, prm_ref, o_ref):
        yv = y_ref[0].astype(jnp.float32)              # (Cout, TMS)
        a = prm_ref[:, 0:1]
        b = prm_ref[:, 1:2]
        al = prm_ref[:, 2:3]
        zn = yv * a + b
        o_ref[0] = jnp.where(zn > 0, zn, al * zn)

    out_flat = pl.pallas_call(
        bn_prelu_kernel,
        out_shape=jax.ShapeDtypeStruct((N, Cout, MS_pad), jnp.float32),
        grid=(N, G),
        in_specs=[pl.BlockSpec((1, Cout, TMS), lambda n, s: (n, 0, s)),
                  pl.BlockSpec((Cout, 4), lambda n, s: (0, 0))],
        out_specs=pl.BlockSpec((1, Cout, TMS), lambda n, s: (n, 0, s)),
        compiler_params=pltpu.CompilerParams(
            dimension_semantics=("parallel", "parallel")),
    )(y_flat, prm)

    # per-sample layout -> NCHW result is a free reshape (no XLA transpose pass)
    return out_flat[:, :, :MS].reshape(N, Cout, Ho, Wo)


def reference(x, weight, bias, gamma, beta, alpha):
    """Pure-JAX reference mirroring the PyTorch forward (training-mode BN)."""
    conv = lax.conv_general_dilated(x, weight, (2, 2), ((1, 1), (1, 1)),
                                    dimension_numbers=('NCHW', 'OIHW', 'NCHW'))
    conv = conv + bias[None, :, None, None]
    N, Cin, H, W = x.shape
    pool = x.reshape(N, Cin, H // 2, 2, W // 2, 2).max(axis=(3, 5))
    y = jnp.concatenate([conv, pool], axis=1)
    mean = y.mean(axis=(0, 2, 3), keepdims=True)
    var = ((y - mean) ** 2).mean(axis=(0, 2, 3), keepdims=True)
    yn = (y - mean) / jnp.sqrt(var + EPS) * gamma[None, :, None, None] \
        + beta[None, :, None, None]
    return jnp.where(yn > 0, yn, alpha * yn)


if __name__ == "__main__":
    N, Cin, H, W = 2, 3, 16, 16
    Cout = 16
    Cc = Cout - 3

    key = jax.random.PRNGKey(0)
    k = jax.random.split(key, 5)
    x = jax.random.normal(k[0], (N, Cin, H, W), jnp.float32)
    weight = jax.random.normal(k[1], (Cc, Cin, 3, 3), jnp.float32) * 0.1
    bias = jax.random.normal(k[2], (Cc,), jnp.float32) * 0.1
    gamma = 1.0 + 0.1 * jax.random.normal(k[3], (Cout,), jnp.float32)
    beta = 0.1 * jax.random.normal(k[4], (Cout,), jnp.float32)
    alpha = jnp.float32(0.25)  # PReLU default init

    fwd = jax.jit(initial_block_forward, static_argnames=("conv_dtype",))
    ref = jax.block_until_ready(reference(x, weight, bias, gamma, beta, alpha))

    # f32 path: tight check against the pure-JAX reference.
    out_f32 = jax.block_until_ready(
        fwd(x, weight, bias, gamma, beta, alpha, conv_dtype=jnp.float32))
    assert out_f32.shape == (N, Cout, H // 2, W // 2), out_f32.shape
    if not bool(jnp.allclose(out_f32, ref, rtol=1e-4, atol=1e-4)):
        err = float(jnp.max(jnp.abs(out_f32 - ref)))
        raise AssertionError(f"f32 Pallas kernel does not match reference (max err {err})")

    # default bf16 path (bf16 patches/weights + bf16 intermediate, f32 accum): loose check.
    out_bf16 = jax.block_until_ready(fwd(x, weight, bias, gamma, beta, alpha))
    if not bool(jnp.allclose(out_bf16, ref, rtol=5e-2, atol=5e-2)):
        err = float(jnp.max(jnp.abs(out_bf16 - ref)))
        raise AssertionError(f"bf16 Pallas kernel deviates too much (max err {err})")

    print("KERNEL_OK")
</pallas_src>

<mosaic_0001>
module attributes {stable_mosaic.version = 11 : i64} {
  func.func @conv_pool_stats_kernel(%arg0: i32, %arg1: i32, %arg2: memref<1x32x64xf32, #tpu.memory_space<vmem>>, %arg3: memref<16x32xf32, #tpu.memory_space<vmem>>, %arg4: memref<1x16x64xf32, #tpu.memory_space<vmem>>, %arg5: memref<1x1x16x2xf32, #tpu.memory_space<vmem>>) attributes {dimension_semantics = [#tpu.dimension_semantics<parallel>, #tpu.dimension_semantics<parallel>], iteration_bounds = array<i64: 2, 1>, scalar_prefetch = 0 : i64, scratch_operands = 0 : i64, tpu.core_type = #tpu.core_type<tc>, window_params = [{transform_indices = @transform_0, window_bounds = array<i64: 1, 32, 64>}, {pipeline_mode = #tpu.pipeline_mode<synchronous>, transform_indices = @transform_1, window_bounds = array<i64: 16, 32>}, {transform_indices = @transform_2, window_bounds = array<i64: 1, 16, 64>}, {transform_indices = @transform_3, window_bounds = array<i64: 1, 1, 16, 2>}]} {
    %c0 = arith.constant 0 : index
    %c0_0 = arith.constant 0 : index
    %c0_1 = arith.constant 0 : index
    %0 = vector.load %arg2[%c0, %c0_0, %c0_1] : memref<1x32x64xf32, #tpu.memory_space<vmem>>, vector<1x32x64xf32>
    %1 = vector.shape_cast %0 : vector<1x32x64xf32> to vector<32x64xf32>
    %c0_2 = arith.constant 0 : index
    %c0_3 = arith.constant 0 : index
    %2 = vector.load %arg3[%c0_2, %c0_3] : memref<16x32xf32, #tpu.memory_space<vmem>>, vector<16x32xf32>
    %cst = arith.constant dense<0.000000e+00> : vector<16x64xf32>
    %3 = tpu.matmul %2, %1, %cst {dimension_numbers = #tpu.dot_dimension_numbers<[1], [0], [0], [1], [0, 0, 1, 1], [], []>} : vector<16x32xf32>, vector<32x64xf32>, vector<16x64xf32> -> vector<16x64xf32>
    %4 = vector.extract_strided_slice %3 {offsets = [0, 0], sizes = [13, 64], strides = [1, 1]} : vector<16x64xf32> to vector<13x64xf32>
    %5 = vector.extract_strided_slice %1 {offsets = [16, 0], sizes = [3, 64], strides = [1, 1]} : vector<32x64xf32> to vector<3x64xf32>
    %6 = vector.extract_strided_slice %1 {offsets = [19, 0], sizes = [3, 64], strides = [1, 1]} : vector<32x64xf32> to vector<3x64xf32>
    %7 = vector.extract_strided_slice %1 {offsets = [22, 0], sizes = [3, 64], strides = [1, 1]} : vector<32x64xf32> to vector<3x64xf32>
    %8 = vector.extract_strided_slice %1 {offsets = [25, 0], sizes = [3, 64], strides = [1, 1]} : vector<32x64xf32> to vector<3x64xf32>
    %9 = arith.maximumf %5, %6 : vector<3x64xf32>
    %10 = arith.maximumf %7, %8 : vector<3x64xf32>
    %11 = arith.maximumf %9, %10 : vector<3x64xf32>
    %c0_4 = arith.constant 0 : index
    %c0_5 = arith.constant 0 : index
    %c0_6 = arith.constant 0 : index
    %12 = vector.load %arg4[%c0_4, %c0_5, %c0_6] : memref<1x16x64xf32, #tpu.memory_space<vmem>>, vector<1x13x64xf32>
    %13 = vector.shape_cast %12 : vector<1x13x64xf32> to vector<13x64xf32>
    %14 = vector.shape_cast %4 : vector<13x64xf32> to vector<1x13x64xf32>
    tpu.vector_store %arg4[%c0_4, %c0_5, %c0_6], %14 {strides = array<i32>} : memref<1x16x64xf32, #tpu.memory_space<vmem>>, vector<1x13x64xf32>,
    %c0_7 = arith.constant 0 : index
    %c13 = arith.constant 13 : index
    %c0_8 = arith.constant 0 : index
    %15 = vector.load %arg4[%c0_7, %c13, %c0_8] : memref<1x16x64xf32, #tpu.memory_space<vmem>>, vector<1x3x64xf32>
    %16 = vector.shape_cast %15 : vector<1x3x64xf32> to vector<3x64xf32>
    %17 = vector.shape_cast %11 : vector<3x64xf32> to vector<1x3x64xf32>
    tpu.vector_store %arg4[%c0_7, %c13, %c0_8], %17 {strides = array<i32>} : memref<1x16x64xf32, #tpu.memory_space<vmem>>, vector<1x3x64xf32>,
    %cst_9 = arith.constant dense<0.000000e+00> : vector<13xf32>
    %18 = vector.multi_reduction <add>, %4, %cst_9 [1] : vector<13x64xf32> to vector<13xf32>
    %19 = vector.shape_cast %18 : vector<13xf32> to vector<13x1xf32>
    %cst_10 = arith.constant dense<0.000000e+00> : vector<3xf32>
    %20 = vector.multi_reduction <add>, %11, %cst_10 [1] : vector<3x64xf32> to vector<3xf32>
    %21 = vector.shape_cast %20 : vector<3xf32> to vector<3x1xf32>
    %22 = tpu.concatenate %19, %21 in 0 : vector<13x1xf32>, vector<3x1xf32> -> vector<16x1xf32>
    %23 = arith.mulf %4, %4 : vector<13x64xf32>
    %cst_11 = arith.constant dense<0.000000e+00> : vector<13xf32>
    %24 = vector.multi_reduction <add>, %23, %cst_11 [1] : vector<13x64xf32> to vector<13xf32>
    %25 = vector.shape_cast %24 : vector<13xf32> to vector<13x1xf32>
    %26 = arith.mulf %11, %11 : vector<3x64xf32>
    %cst_12 = arith.constant dense<0.000000e+00> : vector<3xf32>
    %27 = vector.multi_reduction <add>, %26, %cst_12 [1] : vector<3x64xf32> to vector<3xf32>
    %28 = vector.shape_cast %27 : vector<3xf32> to vector<3x1xf32>
    %29 = tpu.concatenate %25, %28 in 0 : vector<13x1xf32>, vector<3x1xf32> -> vector<16x1xf32>
    %30 = tpu.concatenate %22, %29 in 1 : vector<16x1xf32>, vector<16x1xf32> -> vector<16x2xf32>
    %c0_13 = arith.constant 0 : index
    %c0_14 = arith.constant 0 : index
    %c0_15 = arith.constant 0 : index
    %c0_16 = arith.constant 0 : index
    %31 = vector.load %arg5[%c0_13, %c0_14, %c0_15, %c0_16] : memref<1x1x16x2xf32, #tpu.memory_space<vmem>>, vector<1x1x16x2xf32>
    %32 = vector.shape_cast %31 : vector<1x1x16x2xf32> to vector<16x2xf32>
    %33 = vector.shape_cast %30 : vector<16x2xf32> to vector<1x1x16x2xf32>
    tpu.vector_store %arg5[%c0_13, %c0_14, %c0_15, %c0_16], %33 {strides = array<i32>} : memref<1x1x16x2xf32, #tpu.memory_space<vmem>>, vector<1x1x16x2xf32>,
    return
  }
  func.func @transform_0(%arg0: i32, %arg1: i32) -> (i32, i32, i32) {
    %c0_i32 = arith.constant 0 : i32
    %c0_i32_0 = arith.constant 0 : i32
    return %arg0, %c0_i32, %arg1 : i32, i32, i32
  }
  func.func @transform_1(%arg0: i32, %arg1: i32) -> (i32, i32) {
    %c0_i32 = arith.constant 0 : i32
    %c0_i32_0 = arith.constant 0 : i32
    %c0_i32_1 = arith.constant 0 : i32
    return %c0_i32, %c0_i32_0 : i32, i32
  }
  func.func @transform_2(%arg0: i32, %arg1: i32) -> (i32, i32, i32) {
    %c0_i32 = arith.constant 0 : i32
    %c0_i32_0 = arith.constant 0 : i32
    return %arg0, %c0_i32, %arg1 : i32, i32, i32
  }
  func.func @transform_3(%arg0: i32, %arg1: i32) -> (i32, i32, i32, i32) {
    %c0_i32 = arith.constant 0 : i32
    %c0_i32_0 = arith.constant 0 : i32
    %c0_i32_1 = arith.constant 0 : i32
    return %arg0, %arg1, %c0_i32, %c0_i32_0 : i32, i32, i32, i32
  }
}

module attributes {stable_mosaic.version = 11 : i64} {
  func.func @bn_prelu_kernel(%arg0: i32, %arg1: i32, %arg2: memref<1x16x64xf32, #tpu.memory_space<vmem>>, %arg3: memref<16x4xf32, #tpu.memory_space<vmem>>, %arg4: memref<1x16x64xf32, #tpu.memory_space<vmem>>) attributes {dimension_semantics = [#tpu.dimension_semantics<parallel>, #tpu.dimension_semantics<parallel>], iteration_bounds = array<i64: 2, 1>, scalar_prefetch = 0 : i64, scratch_operands = 0 : i64, tpu.core_type = #tpu.core_type<tc>, window_params = [{transform_indices = @transform_0, window_bounds = array<i64: 1, 16, 64>}, {pipeline_mode = #tpu.pipeline_mode<synchronous>, transform_indices = @transform_1, window_bounds = array<i64: 16, 4>}, {transform_indices = @transform_2, window_bounds = array<i64: 1, 16, 64>}]} {
    %c0 = arith.constant 0 : index
    %c0_0 = arith.constant 0 : index
    %c0_1 = arith.constant 0 : index
    %0 = vector.load %arg2[%c0, %c0_0, %c0_1] : memref<1x16x64xf32, #tpu.memory_space<vmem>>, vector<1x16x64xf32>
    %1 = vector.shape_cast %0 : vector<1x16x64xf32> to vector<16x64xf32>
    %c0_2 = arith.constant 0 : index
    %c0_3 = arith.constant 0 : index
    %2 = vector.load %arg3[%c0_2, %c0_3] : memref<16x4xf32, #tpu.memory_space<vmem>>, vector<16x1xf32>
    %c0_4 = arith.constant 0 : index
    %c1 = arith.constant 1 : index
    %3 = vector.load %arg3[%c0_4, %c1] : memref<16x4xf32, #tpu.memory_space<vmem>>, vector<16x1xf32>
    %c0_5 = arith.constant 0 : index
    %c2 = arith.constant 2 : index
    %4 = vector.load %arg3[%c0_5, %c2] : memref<16x4xf32, #tpu.memory_space<vmem>>, vector<16x1xf32>
    %5 = vector.broadcast %2 : vector<16x1xf32> to vector<16x64xf32>
    %6 = arith.mulf %1, %5 : vector<16x64xf32>
    %7 = vector.broadcast %3 : vector<16x1xf32> to vector<16x64xf32>
    %8 = arith.addf %6, %7 : vector<16x64xf32>
    %cst = arith.constant 0.000000e+00 : f32
    %9 = vector.broadcast %cst : f32 to vector<16x64xf32>
    %10 = arith.cmpf ogt, %8, %9 : vector<16x64xf32>
    %11 = vector.broadcast %4 : vector<16x1xf32> to vector<16x64xf32>
    %12 = arith.mulf %11, %8 : vector<16x64xf32>
    %13 = arith.select %10, %8, %12 : vector<16x64xi1>, vector<16x64xf32>
    %c0_6 = arith.constant 0 : index
    %c0_7 = arith.constant 0 : index
    %c0_8 = arith.constant 0 : index
    %14 = vector.load %arg4[%c0_6, %c0_7, %c0_8] : memref<1x16x64xf32, #tpu.memory_space<vmem>>, vector<1x16x64xf32>
    %15 = vector.shape_cast %14 : vector<1x16x64xf32> to vector<16x64xf32>
    %16 = vector.shape_cast %13 : vector<16x64xf32> to vector<1x16x64xf32>
    tpu.vector_store %arg4[%c0_6, %c0_7, %c0_8], %16 {strides = array<i32>} : memref<1x16x64xf32, #tpu.memory_space<vmem>>, vector<1x16x64xf32>,
    return
  }
  func.func @transform_0(%arg0: i32, %arg1: i32) -> (i32, i32, i32) {
    %c0_i32 = arith.constant 0 : i32
    %c0_i32_0 = arith.constant 0 : i32
    return %arg0, %c0_i32, %arg1 : i32, i32, i32
  }
  func.func @transform_1(%arg0: i32, %arg1: i32) -> (i32, i32) {
    %c0_i32 = arith.constant 0 : i32
    %c0_i32_0 = arith.constant 0 : i32
    %c0_i32_1 = arith.constant 0 : i32
    return %c0_i32, %c0_i32_0 : i32, i32
  }
  func.func @transform_2(%arg0: i32, %arg1: i32) -> (i32, i32, i32) {
    %c0_i32 = arith.constant 0 : i32
    %c0_i32_0 = arith.constant 0 : i32
    return %arg0, %c0_i32, %arg1 : i32, i32, i32
  }
}

</mosaic_0001>

<llo_original>
// kernel: initial_block_forward.2
$region0: #{initial_block_forward.2}
  #allocation0 [shape = 'u32[]', space=smem, size = 0x4, offset = 0x4, fixed_abs, tag = 'smem constant byte address 0x4 - core index']
  #allocation1 [shape = 'u32[144,128]{1,0:T(1,128)}', space=vmem, size = 0x12000, scoped, tag = 'internal scratch']
  %s0 = inlined_call_operand.vmem [shape: f32[2,32,64], index: 0, kind: input, shape index: {}]
  %s1 = inlined_call_operand.vmem [shape: f32[16,32], index: 1, kind: input, shape index: {}]
  %s2 = inlined_call_operand.vmem [shape: f32[2,16,64], index: 2, kind: output, shape index: {0}]
  %s3 = inlined_call_operand.vmem [shape: f32[2,1,16,2], index: 3, kind: output, shape index: {1}]
  %4 = xla_tuple %s2, %s3
  %s5 = sld [smem:[#allocation0]]
  $region49: #{initial_block_forward.2} parent=0
    _
  %s7 = ssub.s32 1, %s5
  %s8 = scalar_select 0, %s7, %s5
  loop: start=0, step=1, limit=4
  $region2: #{initial_block_forward.2} parent=0 // loop_pre_header
    _
  $region3: #{initial_block_forward.2} parent=0 // loop_header
    %s10 = sphi 0, %s14
    %p11 = scmp.ge.s32.totalorder %s10, 4
    %s17 = sphi 0, %s29
    %s18 = sphi 0, %s25
    %s19 = sphi 0, %s17
    %s20 = sphi 0, %s18
    %s21 = sphi 0, %s19
    %s22 = sphi 0, %s20
    %s34 = sphi 0, %s36
    %s37 = sphi 0, %s34
    %s38 = sphi 0, %s37
    %s54 = sphi 0, %s38
    %s58 = sphi 0, %s58
    %s60 = sphi 0, %s58
    %s61 = sphi 0, %s60
    %s75 = sphi 0, %s61
    %s83 = sphi 0, %s85
    %s86 = sphi 0, %s83
    %s87 = sphi 0, %s86
    %s103 = sphi 0, %s87
    %s111 = sphi 0, %s113
    %s114 = sphi 0, %s111
    %s115 = sphi 0, %s114
    %s131 = sphi 0, %s115
  $region4: #{initial_block_forward.2} parent=0 // loop_header_branch
    %13 = sbr.rel (%p11) target = $region8
  $region5: #{initial_block_forward.2} parent=0 // loop_body
    %s15 = ssub.s32 %s10, 1
    %s16 = ssub.s32 %s10, 2
    %s23 = sadd.s32 1, %s18
    %p24 = scmp.ge.s32.totalorder %s23, 1
    %s25 = scalar_select %p24, 0, %s23
    %s26 = sadd.s32 1, %s17
    %s27 = scalar_select %p24, %s26, %s17
    %p28 = scmp.ge.s32.totalorder %s27, 2
    %s29 = scalar_select %p28, 0, %s27
    %s30 = ssub.s32 %s17, %s29
    %s31 = ssub.s32 %s18, %s25
    %s32 = sor.u32 %s30, %s31
    %p33 = scmp.eq.s32.totalorder %s32, 0
    %s35 = sadd.s32 %s34, 1
    %s36 = scalar_select %p33, %s34, %s35
    %p39 = pneg %p33
    %p40 = scmp.eq.s32.totalorder %s10, 1
    %p41 = por %p39, %p40
    %p42 = scmp.ne.s32.totalorder %s34, %s37
    %p43 = scmp.eq.s32.totalorder %s10, 0
    %p44 = por %p42, %p43
    %p45 = scmp.ne.s32.totalorder %s34, %s37
    %p46 = scmp.eq.s32.totalorder %s15, 1
    %p47 = por %p45, %p46
    %p48 = scmp.ne.s32.totalorder %s37, %s38
    %p49 = scmp.eq.s32.totalorder %s15, 0
    %p50 = por %p48, %p49
    %p51 = scmp.ne.s32.totalorder %s37, %s38
    %p52 = scmp.eq.s32.totalorder %s16, 1
    %p53 = por %p51, %p52
    %p55 = scmp.ne.s32.totalorder %s38, %s54
    %p56 = scmp.eq.s32.totalorder %s16, 0
    %p57 = por %p55, %p56
    %s59 = sadd.s32 %s58, 1
    %p62 = scmp.eq.s32.totalorder %s10, 1
    %p63 = scmp.ne.s32.totalorder %s58, %s60
    %p64 = scmp.eq.s32.totalorder %s10, 0
    %p65 = por %p63, %p64
    %p66 = scmp.ne.s32.totalorder %s58, %s60
    %p67 = scmp.eq.s32.totalorder %s15, 1
    %p68 = por %p66, %p67
    %p69 = scmp.ne.s32.totalorder %s60, %s61
    %p70 = scmp.eq.s32.totalorder %s15, 0
    %p71 = por %p69, %p70
    %p72 = scmp.ne.s32.totalorder %s60, %s61
    %p73 = scmp.eq.s32.totalorder %s16, 1
    %p74 = por %p72, %p73
    %p76 = scmp.ne.s32.totalorder %s61, %s75
    %p77 = scmp.eq.s32.totalorder %s16, 0
    %p78 = por %p76, %p77
    %s79 = ssub.s32 %s17, %s29
    %s80 = ssub.s32 %s18, %s25
    %s81 = sor.u32 %s79, %s80
    %p82 = scmp.eq.s32.totalorder %s81, 0
    %s84 = sadd.s32 %s83, 1
    %s85 = scalar_select %p82, %s83, %s84
    %p88 = pneg %p82
    %p89 = scmp.eq.s32.totalorder %s10, 1
    %p90 = por %p88, %p89
    %p91 = scmp.ne.s32.totalorder %s83, %s86
    %p92 = scmp.eq.s32.totalorder %s10, 0
    %p93 = por %p91, %p92
    %p94 = scmp.ne.s32.totalorder %s83, %s86
    %p95 = scmp.eq.s32.totalorder %s15, 1
    %p96 = por %p94, %p95
    %p97 = scmp.ne.s32.totalorder %s86, %s87
    %p98 = scmp.eq.s32.totalorder %s15, 0
    %p99 = por %p97, %p98
    %p100 = scmp.ne.s32.totalorder %s86, %s87
    %p101 = scmp.eq.s32.totalorder %s16, 1
    %p102 = por %p100, %p101
    %p104 = scmp.ne.s32.totalorder %s87, %s103
    %p105 = scmp.eq.s32.totalorder %s16, 0
    %p106 = por %p104, %p105
    %s107 = ssub.s32 %s17, %s29
    %s108 = ssub.s32 %s18, %s25
    %s109 = sor.u32 %s107, %s108
    %p110 = scmp.eq.s32.totalorder %s109, 0
    %s112 = sadd.s32 %s111, 1
    %s113 = scalar_select %p110, %s111, %s112
    %p116 = pneg %p110
    %p117 = scmp.eq.s32.totalorder %s10, 1
    %p118 = por %p116, %p117
    %p119 = scmp.ne.s32.totalorder %s111, %s114
    %p120 = scmp.eq.s32.totalorder %s10, 0
    %p121 = por %p119, %p120
    %p122 = scmp.ne.s32.totalorder %s111, %s114
    %p123 = scmp.eq.s32.totalorder %s15, 1
    %p124 = por %p122, %p123
    %p125 = scmp.ne.s32.totalorder %s114, %s115
    %p126 = scmp.eq.s32.totalorder %s15, 0
    %p127 = por %p125, %p126
    %p128 = scmp.ne.s32.totalorder %s114, %s115
    %p129 = scmp.eq.s32.totalorder %s16, 1
    %p130 = por %p128, %p129
    %p132 = scmp.ne.s32.totalorder %s115, %s131
    %p133 = scmp.eq.s32.totalorder %s16, 0
    %p134 = por %p132, %p133
    %p135 = scmp.le.s32.totalorder 1, %s10
    %p136 = scmp.lt.s32.totalorder %s10, 3
    %p137 = pnand %p135, %p136
    %p138 = pneg %p137
    // Predicated region
    $region9: #{initial_block_forward.2} parent=5 // pred_check
      _
    $region10: #{initial_block_forward.2} parent=5 // pred_check_branch
      %140 = sbr.rel (%p137) target = $region12
    $region11: #{initial_block_forward.2} parent=5 // pred_region
      %s141 = ssub.s32 %s10, 1
      // Predicated region
      $region13: #{initial_block_forward.2} parent=11 // pred_check
        %p142 = pneg %p71
      $region14: #{initial_block_forward.2} parent=11 // pred_check_branch
        %144 = sbr.rel (%p142) target = $region16
      $region15: #{initial_block_forward.2} parent=11 // pred_region
        _
      $region16: #{initial_block_forward.2} parent=11 // pred_fallthru
        _
    $region12: #{initial_block_forward.2} parent=5 // pred_fallthru
      _
    %p145 = scmp.lt.s32.totalorder %s10, 2
    // Predicated region
    $region17: #{initial_block_forward.2} parent=5 // pred_check
      %p146 = pneg %p145
    $region18: #{initial_block_forward.2} parent=5 // pred_check_branch
      %148 = sbr.rel (%p146) target = $region20
    $region19: #{initial_block_forward.2} parent=5 // pred_region
      // Predicated region
      $region21: #{initial_block_forward.2} parent=19 // pred_check
        %p149 = pneg %p44
      $region22: #{initial_block_forward.2} parent=19 // pred_check_branch
        %151 = sbr.rel (%p149) target = $region24
      $region23: #{initial_block_forward.2} parent=19 // pred_region
        %p152 = scmp.lt.s32.totalorder %s17, 1
        %s153 = scalar_select %p152, %s17, 1
        %p154 = scmp.lt.s32.totalorder %s18, 0
        %s155 = scalar_select %p154, %s18, 0
        %s156 = smul.addr %s153, 4
        %s157 = sadd.s32 %s155, %s156
        %s158 = smul.addr %s157, 8
        %s159 = scalar_lea.vmem %s0, %s158
      $region24: #{initial_block_forward.2} parent=19 // pred_fallthru
        _
    $region20: #{initial_block_forward.2} parent=5 // pred_fallthru
      _
    %p160 = scmp.le.s32.totalorder 1, %s10
    %p161 = scmp.lt.s32.totalorder %s10, 3
    %p162 = pnand %p160, %p161
    %p163 = pneg %p162
    // Predicated region
    $region25: #{initial_block_forward.2} parent=5 // pred_check
      _
    $region26: #{initial_block_forward.2} parent=5 // pred_check_branch
      %165 = sbr.rel (%p162) target = $region28
    $region27: #{initial_block_forward.2} parent=5 // pred_region
      %s166 = ssub.s32 %s10, 1
      %p167 = scmp.lt.s32.totalorder %s19, 1
      %s168 = scalar_select %p167, %s19, 1
      %p169 = scmp.lt.s32.totalorder %s20, 0
      %s170 = scalar_select %p169, %s20, 0
      %s171 = smul.addr %s168, 4
      %s172 = sadd.s32 %s170, %s171
      %s173 = smul.addr %s172, 8
      %s174 = scalar_lea.vmem %s0, %s173
      %p175 = pneg %p50
      %p176 = pneg %p47
      %p177 = pneg %p71
      %p178 = pneg %p68
      %p179 = pneg %p99
      %p180 = pneg %p96
      %p181 = scmp.lt.s32.totalorder %s19, 1
      %s182 = scalar_select %p181, %s19, 1
      %p183 = scmp.lt.s32.totalorder %s20, 0
      %s184 = scalar_select %p183, %s20, 0
      %s185 = smul.addr %s182, 2
      %s186 = sadd.s32 %s184, %s185
      %s187 = smul.addr %s186, 8
      %s188 = scalar_lea.vmem %s2, %s187
      %p189 = pneg %p127
      %p190 = pneg %p124
      %p191 = scmp.lt.s32.totalorder %s19, 1
      %s192 = scalar_select %p191, %s19, 1
      %p193 = scmp.lt.s32.totalorder %s20, 0
      %s194 = scalar_select %p193, %s20, 0
      %s195 = smul.addr %s194, 2
      %s196 = smul.addr %s192, 2
      %s197 = sadd.s32 %s195, %s196
      %s198 = smul.addr %s197, 8
      %s199 = scalar_lea.vmem %s3, %s198
      %p200 = scmp.lt.s32.totalorder %s19, 1
      %s201 = scalar_select %p200, %s19, 1
      %p202 = scmp.lt.s32.totalorder %s20, 0
      %s203 = scalar_select %p202, %s20, 0
      %s204 = smul.addr %s201, 4
      %s205 = sadd.s32 %s203, %s204
      %s206 = smul.addr %s205, 8
      %s207 = scalar_lea.vmem %s0, %s206
      %p208 = scmp.lt.s32.totalorder %s19, 1
      %s209 = scalar_select %p208, %s19, 1
      %p210 = scmp.lt.s32.totalorder %s20, 0
      %s211 = scalar_select %p210, %s20, 0
      %s212 = smul.addr %s209, 2
      %s213 = sadd.s32 %s211, %s212
      %s214 = smul.addr %s213, 8
      %s215 = scalar_lea.vmem %s2, %s214
      %p216 = scmp.lt.s32.totalorder %s19, 1
      %s217 = scalar_select %p216, %s19, 1
      %p218 = scmp.lt.s32.totalorder %s20, 0
      %s219 = scalar_select %p218, %s20, 0
      %s220 = smul.addr %s219, 2
      %s221 = smul.addr %s217, 2
      %s222 = sadd.s32 %s220, %s221
      %s223 = smul.addr %s222, 8
      %s224 = scalar_lea.vmem %s3, %s223
      %v225 = vld [vmem:[%s207] sm:$0xff]
      %v226 = vld [vmem:[%s207 + $0x8] sm:$0xff]
      %v227 = vld [vmem:[%s207 + $0x10] sm:$0xff]
      %v228 = vld [vmem:[%s207 + $0x18] sm:$0xff]
      %v229 = vld [vmem:[%s1] sm:$0xff]
      %v230 = vld [vmem:[%s1 + $0x8] sm:$0xff]
      %vm231 = vcmask 261120
      %v233 = vsel %vm231, %v229, 0
      %v236 = vsel %vm231, %v230, 0
      %238 = vmatprep.subr.mxu0 0.0
      %239 = vmatpush1.msra.mxu0 %v225
      %240 = vmatprep.subr.mxu0 0.0
      %241 = vmatpush1.msra.mxu0 %v226
      %242 = vmatprep.subr.mxu0 0.0
      %243 = vmatpush1.msra.mxu0 %v227
      %244 = vmatprep.subr.mxu0 0.0
      %245 = vmatpush1.msra.mxu0 %v228
      %246 = vmatprep.subr.mxu0 0.0
      %247 = vmatpush1.msra.mxu0 0.0
      %248 = vmatprep.subr.mxu0 0.0
      %249 = vmatpush1.msra.mxu0 0.0
      %250 = vmatprep.subr.mxu0 0.0
      %251 = vmatpush1.msra.mxu0 0.0
      %252 = vmatprep.subr.mxu0 0.0
      %253 = vmatpush1.msra.mxu0 0.0
      %254 = vmatprep.subr.mxu0 0.0
      %255 = vmatpush1.msra.mxu0 0.0
      %256 = vmatprep.subr.mxu0 0.0
      %257 = vmatpush1.msra.mxu0 0.0
      %258 = vmatprep.subr.mxu0 0.0
      %259 = vmatpush1.msra.mxu0 0.0
      %260 = vmatprep.subr.mxu0 0.0
      %261 = vmatpush1.msra.mxu0 0.0
      %262 = vmatprep.subr.mxu0 0.0
      %263 = vmatpush1.msra.mxu0 0.0
      %264 = vmatprep.subr.mxu0 0.0
      %265 = vmatpush1.msra.mxu0 0.0
      %266 = vmatprep.subr.mxu0 0.0
      %267 = vmatpush1.msra.mxu0 0.0
      %268 = vmatprep.subr.mxu0 0.0
      %269 = vmatpush1.msra.mxu0 0.0
      %270 = vmatprep.subr.mxu0 0.0
      %271 = vmatpush1.msra.mxu0 0.0
      %272 = vmatprep.subr.mxu0 0.0
      %273 = vmatpush1.msra.mxu0 0.0
      %274 = vmatprep.subr.mxu0 0.0
      %275 = vmatpush1.msra.mxu0 0.0
      %276 = vmatprep.subr.mxu0 0.0
      %277 = vmatpush1.msra.mxu0 0.0
      %278 = vmatprep.subr.mxu0 0.0
      %279 = vmatpush1.msra.mxu0 0.0
      %280 = vmatprep.subr.mxu0 0.0
      %281 = vmatpush1.msra.mxu0 0.0
      %282 = vmatprep.subr.mxu0 0.0
      %283 = vmatpush1.msra.mxu0 0.0
      %284 = vmatprep.subr.mxu0 0.0
      %285 = vmatpush1.msra.mxu0 0.0
      %286 = vmatprep.subr.mxu0 0.0
      %287 = vmatpush1.msra.mxu0 0.0
      %288 = vmatprep.subr.mxu0 0.0
      %289 = vmatpush1.msra.mxu0 0.0
      %290 = vmatprep.subr.mxu0 0.0
      %291 = vmatpush1.msra.mxu0 0.0
      %292 = vmatprep.subr.mxu0 0.0
      %293 = vmatpush1.msra.mxu0 0.0
      %294 = vmatprep.subr.mxu0 0.0
      %295 = vmatpush1.msra.mxu0 0.0
      %296 = vmatprep.subr.mxu0 0.0
      %297 = vmatpush1.msra.mxu0 0.0
      %298 = vmatprep.subr.mxu0 0.0
      %299 = vmatpush1.msra.mxu0 0.0
      %300 = vmatprep.subr.mxu0 0.0
      %301 = vmatpush1.msra.mxu0 0.0
      %302 = vmatprep.mubr.f32.mxu0 0.0
      %303 = vmatmul.mubr.f32.gmra.mrb[0].mxu0 %v233
      %v304 = vpop.f32.mrb[0].mxu0
      %v305 = vadd.f32 0.0, %v304
      %v306 = vpop.f32.mrb[0].mxu0
      %307 = vmatprep.mubr.f32.mxu0 0.0
      %308 = vmatmul.mubr.f32.gmra.mrb[0].mxu0 %v236
      %v309 = vpop.f32.mrb[0].mxu0
      %v310 = vadd.f32 0.0, %v309
      %v311 = vpop.f32.mrb[0].mxu0
      %312 = vdwg.mxu0
      %v314 = vrot.slane %v227, 3
      %v316 = vmax.f32 %v227, %v314
      %v318 = vrot.slane %v228, 3
      %v320 = vmax.f32 %v227, %v318
      %v321 = vmax.f32 %v228, %v318
      %vm324 = vcmask 1041408
      %v325 = vrot.slane %v320, 6
      %v326 = vrot.slane %v321, 6
      %v327 = vsel %vm324, %v325, %v326
      %v329 = vmax.f32 %v316, %v327
      %vm330 = vcmask 523264
      %331 = vst.msk [vmem:[%s215] sm:$0xff] %vm330, %v305
      %vm332 = vcmask 520192
      %333 = vst.msk [vmem:[%s215 + $0x8] sm:$0x1f] %vm332, %v310
      %vm334 = vcmask 518144
      %335 = vst.msk [vmem:[%s215 + $0xd] sm:$0x7] %vm334, %v329
      %v336 = vsel %vm330, %v305, 0.0
      %337 = vadd.xlane.f32.xlu0 %v336
      %v338 = vpop.xlane.xlu0 %337
      %v339 = vsel %vm332, %v310, 0.0
      %340 = vadd.xlane.f32.xlu0 %v339
      %v341 = vpop.xlane.xlu0 %340
      %v342 = vsel %vm334, %v329, 0.0
      %343 = vadd.xlane.f32.xlu0 %v342
      %v344 = vpop.xlane.xlu0 %343
      %v346 = vrot.slane %v344, 3
      %vm348 = vcmask 1044480
      %v349 = vsel %vm348, %v341, %v346
      %v350 = vmul.f32 %v305, %v305
      %v351 = vmul.f32 %v310, %v310
      %v352 = vsel %vm330, %v350, 0.0
      %353 = vadd.xlane.f32.xlu0 %v352
      %v354 = vpop.xlane.xlu0 %353
      %v355 = vsel %vm332, %v351, 0.0
      %356 = vadd.xlane.f32.xlu0 %v355
      %v357 = vpop.xlane.xlu0 %356
      %v358 = vmul.f32 %v329, %v329
      %v359 = vsel %vm334, %v358, 0.0
      %360 = vadd.xlane.f32.xlu0 %v359
      %v361 = vpop.xlane.xlu0 %360
      %v363 = vrot.slane %v361, 3
      %v365 = vsel %vm348, %v357, %v363
      %368 = vrot.lane.b32.xlu0 %v354, 1
      %v369 = vpop.permute.xlu0 %368
      %370 = vrot.lane.b32.xlu0 %v365, 1
      %v371 = vpop.permute.xlu0 %370
      %vm374 = vcmask 7168
      %v375 = vsel %vm374, %v338, %v369
      %v376 = vsel %vm374, %v349, %v371
      %vm377 = vcmask 15360
      %378 = vst.msk [vmem:[%s224] sm:$0xff] %vm377, %v375
      %379 = vst.msk [vmem:[%s224 + $0x8] sm:$0xff] %vm377, %v376
      %p380 = scmp.lt.s32.totalorder %s19, 1
      %s381 = scalar_select %p380, %s19, 1
      %p382 = scmp.lt.s32.totalorder %s20, 0
      %s383 = scalar_select %p382, %s20, 0
      %s384 = smul.addr %s381, 2
      %s385 = sadd.s32 %s383, %s384
      %s386 = smul.addr %s385, 8
      %s387 = scalar_lea.vmem %s2, %s386
      %p388 = scmp.lt.s32.totalorder %s19, 1
      %s389 = scalar_select %p388, %s19, 1
      %p390 = scmp.lt.s32.totalorder %s20, 0
      %s391 = scalar_select %p390, %s20, 0
      %s392 = smul.addr %s391, 2
      %s393 = smul.addr %s389, 2
      %s394 = sadd.s32 %s392, %s393
      %s395 = smul.addr %s394, 8
      %s396 = scalar_lea.vmem %s3, %s395
      // Predicated region
      $region29: #{initial_block_forward.2} parent=27 // pred_check
        %p397 = pneg %p96
      $region30: #{initial_block_forward.2} parent=27 // pred_check_branch
        %399 = sbr.rel (%p397) target = $region32
      $region31: #{initial_block_forward.2} parent=27 // pred_region
        _
      $region32: #{initial_block_forward.2} parent=27 // pred_fallthru
        _
      // Predicated region
      $region33: #{initial_block_forward.2} parent=27 // pred_check
        %p400 = pneg %p124
      $region34: #{initial_block_forward.2} parent=27 // pred_check_branch
        %402 = sbr.rel (%p400) target = $region36
      $region35: #{initial_block_forward.2} parent=27 // pred_region
        _
      $region36: #{initial_block_forward.2} parent=27 // pred_fallthru
        _
    $region28: #{initial_block_forward.2} parent=5 // pred_fallthru
      _
    %p403 = scmp.le.s32.totalorder 2, %s10
    // Predicated region
    $region37: #{initial_block_forward.2} parent=5 // pred_check
      %p404 = pneg %p403
    $region38: #{initial_block_forward.2} parent=5 // pred_check_branch
      %406 = sbr.rel (%p404) target = $region40
    $region39: #{initial_block_forward.2} parent=5 // pred_region
      %s407 = ssub.s32 %s10, 2
      // Predicated region
      $region41: #{initial_block_forward.2} parent=39 // pred_check
        %p408 = pneg %p102
      $region42: #{initial_block_forward.2} parent=39 // pred_check_branch
        %410 = sbr.rel (%p408) target = $region44
      $region43: #{initial_block_forward.2} parent=39 // pred_region
        %p411 = scmp.lt.s32.totalorder %s21, 1
        %s412 = scalar_select %p411, %s21, 1
        %p413 = scmp.lt.s32.totalorder %s22, 0
        %s414 = scalar_select %p413, %s22, 0
        %s415 = smul.addr %s412, 2
        %s416 = sadd.s32 %s414, %s415
        %s417 = smul.addr %s416, 8
        %s418 = scalar_lea.vmem %s2, %s417
      $region44: #{initial_block_forward.2} parent=39 // pred_fallthru
        _
      // Predicated region
      $region45: #{initial_block_forward.2} parent=39 // pred_check
        %p419 = pneg %p130
      $region46: #{initial_block_forward.2} parent=39 // pred_check_branch
        %421 = sbr.rel (%p419) target = $region48
      $region47: #{initial_block_forward.2} parent=39 // pred_region
        %p422 = scmp.lt.s32.totalorder %s21, 1
        %s423 = scalar_select %p422, %s21, 1
        %p424 = scmp.lt.s32.totalorder %s22, 0
        %s425 = scalar_select %p424, %s22, 0
        %s426 = smul.addr %s425, 2
        %s427 = smul.addr %s423, 2
        %s428 = sadd.s32 %s426, %s427
        %s429 = smul.addr %s428, 8
        %s430 = scalar_lea.vmem %s3, %s429
      $region48: #{initial_block_forward.2} parent=39 // pred_fallthru
        _
    $region40: #{initial_block_forward.2} parent=5 // pred_fallthru
      _
  $region6: #{initial_block_forward.2} parent=0 // loop_footer
    %s14 = sadd.s32 1, %s10
  $region7: #{initial_block_forward.2} parent=0 // loop_footer_branch
    %9 = sbr.rel target = $region3
  $region8: #{initial_block_forward.2} parent=0 // loop_exit
    _

// kernel: initial_block_forward.3
$region0: #{initial_block_forward.3}
  #allocation0 [shape = 'u32[]', space=smem, size = 0x4, offset = 0x4, fixed_abs, tag = 'smem constant byte address 0x4 - core index']
  #allocation1 [shape = 'u32[144,128]{1,0:T(1,128)}', space=vmem, size = 0x12000, scoped, tag = 'internal scratch']
  %s0 = inlined_call_operand.vmem [shape: f32[2,16,64], index: 0, kind: input, shape index: {}]
  %s1 = inlined_call_operand.vmem [shape: f32[16,4], index: 1, kind: input, shape index: {}]
  %s2 = inlined_call_operand.vmem [shape: f32[2,16,64], index: 2, kind: output, shape index: {}]
  %s3 = sld [smem:[#allocation0]]
  $region41: #{initial_block_forward.3} parent=0
    _
  %s5 = ssub.s32 1, %s3
  %s6 = scalar_select 0, %s5, %s3
  loop: start=0, step=1, limit=4
  $region2: #{initial_block_forward.3} parent=0 // loop_pre_header
    _
  $region3: #{initial_block_forward.3} parent=0 // loop_header
    %s8 = sphi 0, %s12
    %p9 = scmp.ge.s32.totalorder %s8, 4
    %s15 = sphi 0, %s27
    %s16 = sphi 0, %s23
    %s17 = sphi 0, %s15
    %s18 = sphi 0, %s16
    %s19 = sphi 0, %s17
    %s20 = sphi 0, %s18
    %s32 = sphi 0, %s34
    %s35 = sphi 0, %s32
    %s36 = sphi 0, %s35
    %s52 = sphi 0, %s36
    %s56 = sphi 0, %s56
    %s58 = sphi 0, %s56
    %s59 = sphi 0, %s58
    %s73 = sphi 0, %s59
    %s81 = sphi 0, %s83
    %s84 = sphi 0, %s81
    %s85 = sphi 0, %s84
    %s101 = sphi 0, %s85
  $region4: #{initial_block_forward.3} parent=0 // loop_header_branch
    %11 = sbr.rel (%p9) target = $region8
  $region5: #{initial_block_forward.3} parent=0 // loop_body
    %s13 = ssub.s32 %s8, 1
    %s14 = ssub.s32 %s8, 2
    %s21 = sadd.s32 1, %s16
    %p22 = scmp.ge.s32.totalorder %s21, 1
    %s23 = scalar_select %p22, 0, %s21
    %s24 = sadd.s32 1, %s15
    %s25 = scalar_select %p22, %s24, %s15
    %p26 = scmp.ge.s32.totalorder %s25, 2
    %s27 = scalar_select %p26, 0, %s25
    %s28 = ssub.s32 %s15, %s27
    %s29 = ssub.s32 %s16, %s23
    %s30 = sor.u32 %s28, %s29
    %p31 = scmp.eq.s32.totalorder %s30, 0
    %s33 = sadd.s32 %s32, 1
    %s34 = scalar_select %p31, %s32, %s33
    %p37 = pneg %p31
    %p38 = scmp.eq.s32.totalorder %s8, 1
    %p39 = por %p37, %p38
    %p40 = scmp.ne.s32.totalorder %s32, %s35
    %p41 = scmp.eq.s32.totalorder %s8, 0
    %p42 = por %p40, %p41
    %p43 = scmp.ne.s32.totalorder %s32, %s35
    %p44 = scmp.eq.s32.totalorder %s13, 1
    %p45 = por %p43, %p44
    %p46 = scmp.ne.s32.totalorder %s35, %s36
    %p47 = scmp.eq.s32.totalorder %s13, 0
    %p48 = por %p46, %p47
    %p49 = scmp.ne.s32.totalorder %s35, %s36
    %p50 = scmp.eq.s32.totalorder %s14, 1
    %p51 = por %p49, %p50
    %p53 = scmp.ne.s32.totalorder %s36, %s52
    %p54 = scmp.eq.s32.totalorder %s14, 0
    %p55 = por %p53, %p54
    %s57 = sadd.s32 %s56, 1
    %p60 = scmp.eq.s32.totalorder %s8, 1
    %p61 = scmp.ne.s32.totalorder %s56, %s58
    %p62 = scmp.eq.s32.totalorder %s8, 0
    %p63 = por %p61, %p62
    %p64 = scmp.ne.s32.totalorder %s56, %s58
    %p65 = scmp.eq.s32.totalorder %s13, 1
    %p66 = por %p64, %p65
    %p67 = scmp.ne.s32.totalorder %s58, %s59
    %p68 = scmp.eq.s32.totalorder %s13, 0
    %p69 = por %p67, %p68
    %p70 = scmp.ne.s32.totalorder %s58, %s59
    %p71 = scmp.eq.s32.totalorder %s14, 1
    %p72 = por %p70, %p71
    %p74 = scmp.ne.s32.totalorder %s59, %s73
    %p75 = scmp.eq.s32.totalorder %s14, 0
    %p76 = por %p74, %p75
    %s77 = ssub.s32 %s15, %s27
    %s78 = ssub.s32 %s16, %s23
    %s79 = sor.u32 %s77, %s78
    %p80 = scmp.eq.s32.totalorder %s79, 0
    %s82 = sadd.s32 %s81, 1
    %s83 = scalar_select %p80, %s81, %s82
    %p86 = pneg %p80
    %p87 = scmp.eq.s32.totalorder %s8, 1
    %p88 = por %p86, %p87
    %p89 = scmp.ne.s32.totalorder %s81, %s84
    %p90 = scmp.eq.s32.totalorder %s8, 0
    %p91 = por %p89, %p90
    %p92 = scmp.ne.s32.totalorder %s81, %s84
    %p93 = scmp.eq.s32.totalorder %s13, 1
    %p94 = por %p92, %p93
    %p95 = scmp.ne.s32.totalorder %s84, %s85
    %p96 = scmp.eq.s32.totalorder %s13, 0
    %p97 = por %p95, %p96
    %p98 = scmp.ne.s32.totalorder %s84, %s85
    %p99 = scmp.eq.s32.totalorder %s14, 1
    %p100 = por %p98, %p99
    %p102 = scmp.ne.s32.totalorder %s85, %s101
    %p103 = scmp.eq.s32.totalorder %s14, 0
    %p104 = por %p102, %p103
    %p105 = scmp.le.s32.totalorder 1, %s8
    %p106 = scmp.lt.s32.totalorder %s8, 3
    %p107 = pnand %p105, %p106
    %p108 = pneg %p107
    // Predicated region
    $region9: #{initial_block_forward.3} parent=5 // pred_check
      _
    $region10: #{initial_block_forward.3} parent=5 // pred_check_branch
      %110 = sbr.rel (%p107) target = $region12
    $region11: #{initial_block_forward.3} parent=5 // pred_region
      %s111 = ssub.s32 %s8, 1
      // Predicated region
      $region13: #{initial_block_forward.3} parent=11 // pred_check
        %p112 = pneg %p69
      $region14: #{initial_block_forward.3} parent=11 // pred_check_branch
        %114 = sbr.rel (%p112) target = $region16
      $region15: #{initial_block_forward.3} parent=11 // pred_region
        _
      $region16: #{initial_block_forward.3} parent=11 // pred_fallthru
        _
    $region12: #{initial_block_forward.3} parent=5 // pred_fallthru
      _
    %p115 = scmp.lt.s32.totalorder %s8, 2
    // Predicated region
    $region17: #{initial_block_forward.3} parent=5 // pred_check
      %p116 = pneg %p115
    $region18: #{initial_block_forward.3} parent=5 // pred_check_branch
      %118 = sbr.rel (%p116) target = $region20
    $region19: #{initial_block_forward.3} parent=5 // pred_region
      // Predicated region
      $region21: #{initial_block_forward.3} parent=19 // pred_check
        %p119 = pneg %p42
      $region22: #{initial_block_forward.3} parent=19 // pred_check_branch
        %121 = sbr.rel (%p119) target = $region24
      $region23: #{initial_block_forward.3} parent=19 // pred_region
        %p122 = scmp.lt.s32.totalorder %s15, 1
        %s123 = scalar_select %p122, %s15, 1
        %p124 = scmp.lt.s32.totalorder %s16, 0
        %s125 = scalar_select %p124, %s16, 0
        %s126 = smul.addr %s123, 2
        %s127 = sadd.s32 %s125, %s126
        %s128 = smul.addr %s127, 8
        %s129 = scalar_lea.vmem %s0, %s128
      $region24: #{initial_block_forward.3} parent=19 // pred_fallthru
        _
    $region20: #{initial_block_forward.3} parent=5 // pred_fallthru
      _
    %p130 = scmp.le.s32.totalorder 1, %s8
    %p131 = scmp.lt.s32.totalorder %s8, 3
    %p132 = pnand %p130, %p131
    %p133 = pneg %p132
    // Predicated region
    $region25: #{initial_block_forward.3} parent=5 // pred_check
      _
    $region26: #{initial_block_forward.3} parent=5 // pred_check_branch
      %135 = sbr.rel (%p132) target = $region28
    $region27: #{initial_block_forward.3} parent=5 // pred_region
      %s136 = ssub.s32 %s8, 1
      %p137 = scmp.lt.s32.totalorder %s17, 1
      %s138 = scalar_select %p137, %s17, 1
      %p139 = scmp.lt.s32.totalorder %s18, 0
      %s140 = scalar_select %p139, %s18, 0
      %s141 = smul.addr %s138, 2
      %s142 = sadd.s32 %s140, %s141
      %s143 = smul.addr %s142, 8
      %s144 = scalar_lea.vmem %s0, %s143
      %p145 = pneg %p48
      %p146 = pneg %p45
      %p147 = pneg %p69
      %p148 = pneg %p66
      %p149 = pneg %p97
      %p150 = pneg %p94
      %p151 = scmp.lt.s32.totalorder %s17, 1
      %s152 = scalar_select %p151, %s17, 1
      %p153 = scmp.lt.s32.totalorder %s18, 0
      %s154 = scalar_select %p153, %s18, 0
      %s155 = smul.addr %s152, 2
      %s156 = sadd.s32 %s154, %s155
      %s157 = smul.addr %s156, 8
      %s158 = scalar_lea.vmem %s2, %s157
      %p159 = scmp.lt.s32.totalorder %s17, 1
      %s160 = scalar_select %p159, %s17, 1
      %p161 = scmp.lt.s32.totalorder %s18, 0
      %s162 = scalar_select %p161, %s18, 0
      %s163 = smul.addr %s160, 2
      %s164 = sadd.s32 %s162, %s163
      %s165 = smul.addr %s164, 8
      %s166 = scalar_lea.vmem %s0, %s165
      %p167 = scmp.lt.s32.totalorder %s17, 1
      %s168 = scalar_select %p167, %s17, 1
      %p169 = scmp.lt.s32.totalorder %s18, 0
      %s170 = scalar_select %p169, %s18, 0
      %s171 = smul.addr %s168, 2
      %s172 = sadd.s32 %s170, %s171
      %s173 = smul.addr %s172, 8
      %s174 = scalar_lea.vmem %s2, %s173
      %v175 = vld [vmem:[%s166] sm:$0xff]
      %v176 = vld [vmem:[%s166 + $0x8] sm:$0xff]
      %v177 = vld [vmem:[%s1] sm:$0xff]
      %v178 = vld [vmem:[%s1 + $0x8] sm:$0xff]
      %180 = vset.pattern.permute.xlu0 0
      %181 = vperm.xlu0 %180, %v177
      %v182 = vpop.permute.xlu0 %181
      %185 = vset.pattern.permute.xlu0 0
      %186 = vperm.xlu0 %185, %v178
      %v187 = vpop.permute.xlu0 %186
      %v189 = vmul.f32 %v175, %v182
      %v190 = vmul.f32 %v176, %v187
      %191 = vset.pattern.permute.xlu0 1
      %192 = vperm.xlu0 %191, %v177
      %v193 = vpop.permute.xlu0 %192
      %195 = vset.pattern.permute.xlu0 1
      %196 = vperm.xlu0 %195, %v178
      %v197 = vpop.permute.xlu0 %196
      %v199 = vadd.f32 %v189, %v193
      %v200 = vadd.f32 %v190, %v197
      %vm201 = vcmp.gt.f32.partialorder %v199, 0.0
      %vm202 = vcmp.gt.f32.partialorder %v200, 0.0
      %203 = vset.pattern.permute.xlu0 2
      %204 = vperm.xlu0 %203, %v177
      %v205 = vpop.permute.xlu0 %204
      %207 = vset.pattern.permute.xlu0 2
      %208 = vperm.xlu0 %207, %v178
      %v209 = vpop.permute.xlu0 %208
      %v211 = vmul.f32 %v205, %v199
      %v212 = vmul.f32 %v209, %v200
      %v213 = vsel %vm201, %v199, %v211
      %v214 = vsel %vm202, %v200, %v212
      %vm215 = vcmask 523264
      %216 = vst.msk [vmem:[%s174] sm:$0xff] %vm215, %v213
      %217 = vst.msk [vmem:[%s174 + $0x8] sm:$0xff] %vm215, %v214
      %p218 = scmp.lt.s32.totalorder %s17, 1
      %s219 = scalar_select %p218, %s17, 1
      %p220 = scmp.lt.s32.totalorder %s18, 0
      %s221 = scalar_select %p220, %s18, 0
      %s222 = smul.addr %s219, 2
      %s223 = sadd.s32 %s221, %s222
      %s224 = smul.addr %s223, 8
      %s225 = scalar_lea.vmem %s2, %s224
      // Predicated region
      $region29: #{initial_block_forward.3} parent=27 // pred_check
        %p226 = pneg %p94
      $region30: #{initial_block_forward.3} parent=27 // pred_check_branch
        %228 = sbr.rel (%p226) target = $region32
      $region31: #{initial_block_forward.3} parent=27 // pred_region
        _
      $region32: #{initial_block_forward.3} parent=27 // pred_fallthru
        _
    $region28: #{initial_block_forward.3} parent=5 // pred_fallthru
      _
    %p229 = scmp.le.s32.totalorder 2, %s8
    // Predicated region
    $region33: #{initial_block_forward.3} parent=5 // pred_check
      %p230 = pneg %p229
    $region34: #{initial_block_forward.3} parent=5 // pred_check_branch
      %232 = sbr.rel (%p230) target = $region36
    $region35: #{initial_block_forward.3} parent=5 // pred_region
      %s233 = ssub.s32 %s8, 2
      // Predicated region
      $region37: #{initial_block_forward.3} parent=35 // pred_check
        %p234 = pneg %p100
      $region38: #{initial_block_forward.3} parent=35 // pred_check_branch
        %236 = sbr.rel (%p234) target = $region40
      $region39: #{initial_block_forward.3} parent=35 // pred_region
        %p237 = scmp.lt.s32.totalorder %s19, 1
        %s238 = scalar_select %p237, %s19, 1
        %p239 = scmp.lt.s32.totalorder %s20, 0
        %s240 = scalar_select %p239, %s20, 0
        %s241 = smul.addr %s238, 2
        %s242 = sadd.s32 %s240, %s241
        %s243 = smul.addr %s242, 8
        %s244 = scalar_lea.vmem %s2, %s243
      $region40: #{initial_block_forward.3} parent=35 // pred_fallthru
        _
    $region36: #{initial_block_forward.3} parent=5 // pred_fallthru
      _
  $region6: #{initial_block_forward.3} parent=0 // loop_footer
    %s12 = sadd.s32 1, %s8
  $region7: #{initial_block_forward.3} parent=0 // loop_footer_branch
    %7 = sbr.rel target = $region3
  $region8: #{initial_block_forward.3} parent=0 // loop_exit
    _

</llo_original>
